<compile_context>
chip_gen: v5e
topology: v5e:2x2
jax: 0.10.0
libtpu: 0.0.40
codegen_flags: <defaults>
</compile_context>

<pallas_src>
import jax
import jax.numpy as jnp
from jax.experimental import pallas as pl
from jax.experimental.pallas import tpu as pltpu


def _round_up(x: int, m: int) -> int:
    return ((x + m - 1) // m) * m


def _media_emb_kernel(xf_ref, w_ref, tem_ref, out_ref):
    # xf_ref : (TS, K)   rows of x_f for (seq-tile s, batch b); batch dim squeezed
    # w_ref  : (K, D)    media_emb.weight.T  (constant block index -> DMA'd once)
    # tem_ref: (TS, D)   temporal-embedding rows for this seq tile (revisited across b)
    # out_ref: (TS, D)
    acc = jnp.dot(xf_ref[...], w_ref[...], preferred_element_type=jnp.float32)
    out_ref[...] = (acc + tem_ref[...].astype(jnp.float32)).astype(out_ref.dtype)


def perceiver_resampler_fwd(x_f, media_w, media_tem_emb, latents, latents_pos_emb,
                            *, seq_tile=512):
    """Forward of Perceiver_resampler up to the (externally defined) layer stack.

    x_f            : (B, S, media_dim)
    media_w        : (media_dim, d_model)   (transposed nn.Linear weight, no bias)
    media_tem_emb  : (S, d_model)
    latents        : (n_latents, d_model)
    latents_pos_emb: (n_latents, d_model)

    Returns (x_f_emb, x) with
      x_f_emb : (B, S, d_model)          = media_emb(x_f) + media_tem_emb
      x       : (B, n_latents, d_model)  = broadcast(latents + latents_pos_emb)
    """
    B, S, media_dim = x_f.shape
    d_model = media_w.shape[1]
    n_latents = latents.shape[0]
    out_dtype = x_f.dtype

    # --- latent init: batch-invariant -> plain JAX broadcast, no kernel traffic. ---
    x_lat = jnp.broadcast_to(
        (latents + latents_pos_emb)[None], (B, n_latents, d_model)).astype(out_dtype)

    xf_item = jnp.dtype(x_f.dtype).itemsize
    w_item = jnp.dtype(media_w.dtype).itemsize
    tem_item = jnp.dtype(media_tem_emb.dtype).itemsize
    out_item = jnp.dtype(out_dtype).itemsize

    # --- seq-tile selection: sublane-aligned (16 for packed sub-32-bit, else 8);
    #     full-extent block (always legal) when the tile covers all of S. ---
    gran = 16 if xf_item < 4 else 8
    seq_tile = max(gran, (int(seq_tile) // gran) * gran)
    ts = S if seq_tile >= S else seq_tile

    # --- VMEM budget: query hardware (v7x 64 MiB, v5e/v6e 128 MiB), leave headroom,
    #     shrink the seq tile until the double-buffered blocks fit. ---
    try:
        vmem_cap = int(pltpu.get_tpu_info().vmem_capacity_bytes)
    except Exception:
        vmem_cap = 64 << 20
    budget = min(vmem_cap * 3 // 4, 100 << 20)

    w_bytes = media_dim * d_model * w_item

    def step_bytes(t):
        # conservative: assume the weight is double-buffered (fallback path)
        return (2 * t * media_dim * xf_item
                + 2 * t * d_model * tem_item
                + 2 * t * d_model * out_item
                + 2 * w_bytes)

    while ts > gran and step_bytes(ts) > budget:
        new_ts = max(gran, ((ts // 2) // gran) * gran)
        if new_ts == ts:
            break
        ts = new_ts

    vmem_limit = int(min(max(step_bytes(ts) + (2 << 20), 32 << 20), budget))

    num_s_tiles = pl.cdiv(S, ts)
    # Batch innermost: tem's block index (s, 0) is constant across b -> its DMA is
    # skipped on revisit; seq-tile axis stays "parallel" for TC sharding.
    grid = (num_s_tiles, B)

    cost = pl.CostEstimate(
        flops=2 * B * S * media_dim * d_model,
        transcendentals=0,
        bytes_accessed=(B * S * media_dim * xf_item          # x_f read once
                        + w_bytes                            # weight read once
                        + S * d_model * tem_item             # tem read once (revisit)
                        + B * S * d_model * out_item),       # output written once
    )

    def build(single_buffer_weight):
        if single_buffer_weight:
            w_spec = pl.BlockSpec((media_dim, d_model), lambda s, b: (0, 0),
                                  pipeline_mode=pl.Buffered(1))
        else:
            w_spec = pl.BlockSpec((media_dim, d_model), lambda s, b: (0, 0))
        grid_spec = pltpu.PrefetchScalarGridSpec(
            num_scalar_prefetch=0,
            grid=grid,
            in_specs=[
                pl.BlockSpec((pl.Squeezed(), ts, media_dim), lambda s, b: (b, s, 0)),
                w_spec,
                pl.BlockSpec((ts, d_model), lambda s, b: (s, 0)),
            ],
            out_specs=pl.BlockSpec((pl.Squeezed(), ts, d_model), lambda s, b: (b, s, 0)),
        )
        return pl.pallas_call(
            _media_emb_kernel,
            out_shape=jax.ShapeDtypeStruct((B, S, d_model), out_dtype),
            grid_spec=grid_spec,
            compiler_params=pltpu.CompilerParams(
                dimension_semantics=("parallel", "arbitrary"),
                vmem_limit_bytes=vmem_limit,
            ),
            cost_estimate=cost,
        )

    try:
        xf_emb = build(single_buffer_weight=True)(x_f, media_w, media_tem_emb)
    except Exception:
        # Fallback if single-buffering via pl.Buffered(1) is unsupported in this JAX.
        xf_emb = build(single_buffer_weight=False)(x_f, media_w, media_tem_emb)

    return xf_emb, x_lat


if __name__ == "__main__":
    # Small, module-consistent shapes.
    B = 2
    media_seqlen = 8
    media_dim = 32
    d_model = 32
    n_latents = 8

    key = jax.random.PRNGKey(0)
    k_xf, k_w, k_tem, k_lat, k_pos = jax.random.split(key, 5)

    x_f = jax.random.normal(k_xf, (B, media_seqlen, media_dim), dtype=jnp.float32)
    media_w = jax.random.uniform(k_w, (media_dim, d_model), dtype=jnp.float32,
                                 minval=-0.1, maxval=0.1)       # = media_emb.weight.T
    media_tem_emb = jax.random.uniform(k_tem, (media_seqlen, d_model), dtype=jnp.float32)
    latents = jax.random.uniform(k_lat, (n_latents, d_model), dtype=jnp.float32)
    latents_pos_emb = jax.random.uniform(k_pos, (n_latents, d_model), dtype=jnp.float32)

    # f32 path.
    xf_emb, x = perceiver_resampler_fwd(x_f, media_w, media_tem_emb,
                                        latents, latents_pos_emb)
    jax.block_until_ready((xf_emb, x))

    xf_emb_ref = jnp.einsum("bsm,md->bsd", x_f, media_w) + media_tem_emb
    x_ref = jnp.broadcast_to((latents + latents_pos_emb)[None], (B, n_latents, d_model))
    assert xf_emb.shape == (B, media_seqlen, d_model)
    assert x.shape == (B, n_latents, d_model)
    assert jnp.allclose(xf_emb, xf_emb_ref, atol=1e-5, rtol=1e-5)
    assert jnp.allclose(x, x_ref, atol=1e-6, rtol=1e-6)

    # Boundary-masking path: S not a multiple of the seq tile (no pad / slice anywhere).
    S2 = 12
    x_f2 = jax.random.normal(k_xf, (B, S2, media_dim), dtype=jnp.float32)
    tem2 = jax.random.uniform(k_tem, (S2, d_model), dtype=jnp.float32)
    xf_emb2, _ = perceiver_resampler_fwd(x_f2, media_w, tem2, latents, latents_pos_emb,
                                         seq_tile=8)
    jax.block_until_ready(xf_emb2)
    ref2 = jnp.einsum("bsm,md->bsd", x_f2, media_w) + tem2
    assert xf_emb2.shape == (B, S2, d_model)
    assert jnp.allclose(xf_emb2, ref2, atol=1e-5, rtol=1e-5)

    # bf16 inputs straight from the caller (no wrapper-side cast; f32 accumulation).
    xf_emb_bf16, _ = perceiver_resampler_fwd(x_f.astype(jnp.bfloat16),
                                             media_w.astype(jnp.bfloat16),
                                             media_tem_emb, latents, latents_pos_emb)
    jax.block_until_ready(xf_emb_bf16)
    assert jnp.allclose(xf_emb_bf16.astype(jnp.float32), xf_emb_ref, atol=3e-2, rtol=3e-2)

    print("KERNEL_OK")
</pallas_src>

<mosaic_0001>
module attributes {stable_mosaic.version = 11 : i64} {
  func.func @_media_emb_kernel(%arg0: i32, %arg1: i32, %arg2: memref<1x8x32xf32, #tpu.memory_space<vmem>>, %arg3: memref<32x32xf32, #tpu.memory_space<vmem>>, %arg4: memref<8x32xf32, #tpu.memory_space<vmem>>, %arg5: memref<1x8x32xf32, #tpu.memory_space<vmem>>) attributes {dimension_semantics = [#tpu.dimension_semantics<parallel>, #tpu.dimension_semantics<arbitrary>], iteration_bounds = array<i64: 1, 2>, scalar_prefetch = 0 : i64, scratch_operands = 0 : i64, tpu.core_type = #tpu.core_type<tc>, window_params = [{transform_indices = @transform_0, window_bounds = array<i64: 1, 8, 32>}, {pipeline_mode = #tpu.pipeline_mode<synchronous>, transform_indices = @transform_1, window_bounds = array<i64: 32, 32>}, {transform_indices = @transform_2, window_bounds = array<i64: 8, 32>}, {transform_indices = @transform_3, window_bounds = array<i64: 1, 8, 32>}]} {
    %c0 = arith.constant 0 : index
    %c0_0 = arith.constant 0 : index
    %c0_1 = arith.constant 0 : index
    %0 = vector.load %arg2[%c0, %c0_0, %c0_1] : memref<1x8x32xf32, #tpu.memory_space<vmem>>, vector<1x8x32xf32>
    %1 = vector.shape_cast %0 : vector<1x8x32xf32> to vector<8x32xf32>
    %c0_2 = arith.constant 0 : index
    %c0_3 = arith.constant 0 : index
    %2 = vector.load %arg3[%c0_2, %c0_3] : memref<32x32xf32, #tpu.memory_space<vmem>>, vector<32x32xf32>
    %cst = arith.constant dense<0.000000e+00> : vector<8x32xf32>
    %3 = tpu.matmul %1, %2, %cst {dimension_numbers = #tpu.dot_dimension_numbers<[1], [0], [0], [1], [0, 0, 1, 1], [], []>} : vector<8x32xf32>, vector<32x32xf32>, vector<8x32xf32> -> vector<8x32xf32>
    %c0_4 = arith.constant 0 : index
    %c0_5 = arith.constant 0 : index
    %4 = vector.load %arg4[%c0_4, %c0_5] : memref<8x32xf32, #tpu.memory_space<vmem>>, vector<8x32xf32>
    %5 = arith.addf %3, %4 : vector<8x32xf32>
    %c0_6 = arith.constant 0 : index
    %c0_7 = arith.constant 0 : index
    %c0_8 = arith.constant 0 : index
    %6 = vector.load %arg5[%c0_6, %c0_7, %c0_8] : memref<1x8x32xf32, #tpu.memory_space<vmem>>, vector<1x8x32xf32>
    %7 = vector.shape_cast %6 : vector<1x8x32xf32> to vector<8x32xf32>
    %8 = vector.shape_cast %5 : vector<8x32xf32> to vector<1x8x32xf32>
    tpu.vector_store %arg5[%c0_6, %c0_7, %c0_8], %8 {strides = array<i32>} : memref<1x8x32xf32, #tpu.memory_space<vmem>>, vector<1x8x32xf32>,
    return
  }
  func.func @transform_0(%arg0: i32, %arg1: i32) -> (i32, i32, i32) {
    %c0_i32 = arith.constant 0 : i32
    %c0_i32_0 = arith.constant 0 : i32
    return %arg1, %arg0, %c0_i32 : i32, i32, i32
  }
  func.func @transform_1(%arg0: i32, %arg1: i32) -> (i32, i32) {
    %c0_i32 = arith.constant 0 : i32
    %c0_i32_0 = arith.constant 0 : i32
    %c0_i32_1 = arith.constant 0 : i32
    return %c0_i32, %c0_i32_0 : i32, i32
  }
  func.func @transform_2(%arg0: i32, %arg1: i32) -> (i32, i32) {
    %c0_i32 = arith.constant 0 : i32
    %c0_i32_0 = arith.constant 0 : i32
    return %arg0, %c0_i32 : i32, i32
  }
  func.func @transform_3(%arg0: i32, %arg1: i32) -> (i32, i32, i32) {
    %c0_i32 = arith.constant 0 : i32
    %c0_i32_0 = arith.constant 0 : i32
    return %arg1, %arg0, %c0_i32 : i32, i32, i32
  }
}

module attributes {stable_mosaic.version = 11 : i64} {
  func.func @_media_emb_kernel(%arg0: i32, %arg1: i32, %arg2: memref<1x8x32xf32, #tpu.memory_space<vmem>>, %arg3: memref<32x32xf32, #tpu.memory_space<vmem>>, %arg4: memref<8x32xf32, #tpu.memory_space<vmem>>, %arg5: memref<1x8x32xf32, #tpu.memory_space<vmem>>) attributes {dimension_semantics = [#tpu.dimension_semantics<parallel>, #tpu.dimension_semantics<arbitrary>], iteration_bounds = array<i64: 1, 2>, scalar_prefetch = 0 : i64, scratch_operands = 0 : i64, tpu.core_type = #tpu.core_type<tc>, window_params = [{transform_indices = @transform_0, window_bounds = array<i64: 1, 8, 32>}, {pipeline_mode = #tpu.pipeline_mode<synchronous>, transform_indices = @transform_1, window_bounds = array<i64: 32, 32>}, {transform_indices = @transform_2, window_bounds = array<i64: 8, 32>}, {transform_indices = @transform_3, window_bounds = array<i64: 1, 8, 32>}]} {
    %c0 = arith.constant 0 : index
    %c0_0 = arith.constant 0 : index
    %c0_1 = arith.constant 0 : index
    %0 = vector.load %arg2[%c0, %c0_0, %c0_1] : memref<1x8x32xf32, #tpu.memory_space<vmem>>, vector<1x8x32xf32>
    %1 = vector.shape_cast %0 : vector<1x8x32xf32> to vector<8x32xf32>
    %c0_2 = arith.constant 0 : index
    %c0_3 = arith.constant 0 : index
    %2 = vector.load %arg3[%c0_2, %c0_3] : memref<32x32xf32, #tpu.memory_space<vmem>>, vector<32x32xf32>
    %cst = arith.constant dense<0.000000e+00> : vector<8x32xf32>
    %3 = tpu.matmul %1, %2, %cst {dimension_numbers = #tpu.dot_dimension_numbers<[1], [0], [0], [1], [0, 0, 1, 1], [], []>} : vector<8x32xf32>, vector<32x32xf32>, vector<8x32xf32> -> vector<8x32xf32>
    %c0_4 = arith.constant 0 : index
    %c0_5 = arith.constant 0 : index
    %4 = vector.load %arg4[%c0_4, %c0_5] : memref<8x32xf32, #tpu.memory_space<vmem>>, vector<8x32xf32>
    %5 = arith.addf %3, %4 : vector<8x32xf32>
    %c0_6 = arith.constant 0 : index
    %c0_7 = arith.constant 0 : index
    %c0_8 = arith.constant 0 : index
    %6 = vector.load %arg5[%c0_6, %c0_7, %c0_8] : memref<1x8x32xf32, #tpu.memory_space<vmem>>, vector<1x8x32xf32>
    %7 = vector.shape_cast %6 : vector<1x8x32xf32> to vector<8x32xf32>
    %8 = vector.shape_cast %5 : vector<8x32xf32> to vector<1x8x32xf32>
    tpu.vector_store %arg5[%c0_6, %c0_7, %c0_8], %8 {strides = array<i32>} : memref<1x8x32xf32, #tpu.memory_space<vmem>>, vector<1x8x32xf32>,
    return
  }
  func.func @transform_0(%arg0: i32, %arg1: i32) -> (i32, i32, i32) {
    %c0_i32 = arith.constant 0 : i32
    %c0_i32_0 = arith.constant 0 : i32
    return %arg1, %arg0, %c0_i32 : i32, i32, i32
  }
  func.func @transform_1(%arg0: i32, %arg1: i32) -> (i32, i32) {
    %c0_i32 = arith.constant 0 : i32
    %c0_i32_0 = arith.constant 0 : i32
    %c0_i32_1 = arith.constant 0 : i32
    return %c0_i32, %c0_i32_0 : i32, i32
  }
  func.func @transform_2(%arg0: i32, %arg1: i32) -> (i32, i32) {
    %c0_i32 = arith.constant 0 : i32
    %c0_i32_0 = arith.constant 0 : i32
    return %arg0, %c0_i32 : i32, i32
  }
  func.func @transform_3(%arg0: i32, %arg1: i32) -> (i32, i32, i32) {
    %c0_i32 = arith.constant 0 : i32
    %c0_i32_0 = arith.constant 0 : i32
    return %arg1, %arg0, %c0_i32 : i32, i32, i32
  }
}

</mosaic_0001>

<llo_original>
// kernel: tpu_custom_call.1
$region0: #{tpu_custom_call.1}
  #allocation0 [shape = 'u32[]', space=smem, size = 0x4, offset = 0x4, fixed_abs, tag = 'smem constant byte address 0x4 - core index']
  #allocation1 [shape = 'u32[72,128]{1,0:T(1,128)}', space=vmem, size = 0x9000, scoped, tag = 'internal scratch']
  %s0 = inlined_call_operand.hbm [shape: f32[2,8,32], index: 0, kind: input, shape index: {}]
  %s1 = inlined_call_operand.hbm [shape: f32[32,32], index: 1, kind: input, shape index: {}]
  %s2 = inlined_call_operand.hbm [shape: f32[8,32], index: 2, kind: input, shape index: {}]
  %s3 = inlined_call_operand.hbm [shape: f32[2,8,32], index: 3, kind: output, shape index: {}]
  %s4 = sld [smem:[#allocation0]]
  $region57: #{tpu_custom_call.1} parent=0
    _
  %s6 = ssub.s32 1, %s4
  %s7 = scalar_select 0, %s6, %s4
  $region1: #{tpu_custom_call.1} parent=0
    #allocation2 [shape = 'u8[8192]{0}', space=vmem, size = 0x2000, scoped, tag = 'input window, operand 0']
    #allocation3 [shape = 's32[2]{0}', space=sflag, size = 0x8, scoped, tag = 'scoped memory for tpu_custom_call.1']
    #allocation4 [shape = 's32[2]{0}', space=sflag, size = 0x8, scoped, tag = 'scoped memory for tpu_custom_call.1']
    #allocation5 [shape = 'u8[16384]{0}', space=vmem, size = 0x4000, scoped, tag = 'input window, operand 1, single buffered']
    #allocation6 [shape = 's32[1]{0}', space=sflag, size = 0x4, scoped, tag = 'scoped memory for tpu_custom_call.1']
    #allocation7 [shape = 'u8[4096]{0}', space=vmem, size = 0x1000, scoped, tag = 'input window, operand 2, single buffered']
    #allocation8 [shape = 'u8[8192]{0}', space=vmem, size = 0x2000, scoped, tag = 'output window, operand 0']
    %8 = vsyncpa [#allocation3], 0
    %s9 = scalar_lea.sflag [#allocation3], 1
    %10 = vsyncpa %s9, 0
    %11 = vsyncpa [#allocation6], 0
    %12 = vsyncpa [#allocation4], 0
    %s13 = scalar_lea.sflag [#allocation4], 1
    %14 = vsyncpa %s13, 0
    loop: start=0, step=1, limit=4
    $region2: #{tpu_custom_call.1} parent=1 // loop_pre_header
      _
    $region3: #{tpu_custom_call.1} parent=1 // loop_header
      %s16 = sphi 0, %s20
      %p17 = scmp.ge.s32.totalorder %s16, 4
      %s23 = sphi 0, %s35
      %s24 = sphi 0, %s31
      %s25 = sphi 0, %s23
      %s26 = sphi 0, %s24
      %s27 = sphi 0, %s25
      %s28 = sphi 0, %s26
      %s40 = sphi 0, %s42
      %s43 = sphi 0, %s40
      %s44 = sphi 0, %s43
      %s60 = sphi 0, %s44
      %s64 = sphi 0, %s64
      %s66 = sphi 0, %s64
      %s67 = sphi 0, %s66
      %s81 = sphi 0, %s67
      %s87 = sphi 0, %s89
      %s90 = sphi 0, %s87
      %s91 = sphi 0, %s90
      %s107 = sphi 0, %s91
      %s115 = sphi 0, %s117
      %s118 = sphi 0, %s115
      %s119 = sphi 0, %s118
      %s135 = sphi 0, %s119
    $region4: #{tpu_custom_call.1} parent=1 // loop_header_branch
      %19 = sbr.rel (%p17) target = $region8
    $region5: #{tpu_custom_call.1} parent=1 // loop_body
      %s21 = ssub.s32 %s16, 1
      %s22 = ssub.s32 %s16, 2
      %s29 = sadd.s32 1, %s24
      %p30 = scmp.ge.s32.totalorder %s29, 2
      %s31 = scalar_select %p30, 0, %s29
      %s32 = sadd.s32 1, %s23
      %s33 = scalar_select %p30, %s32, %s23
      %p34 = scmp.ge.s32.totalorder %s33, 1
      %s35 = scalar_select %p34, 0, %s33
      %s36 = ssub.s32 %s24, %s31
      %s37 = ssub.s32 %s23, %s35
      %s38 = sor.u32 %s36, %s37
      %p39 = scmp.eq.s32.totalorder %s38, 0
      %s41 = sadd.s32 %s40, 1
      %s42 = scalar_select %p39, %s40, %s41
      %p45 = pneg %p39
      %p46 = scmp.eq.s32.totalorder %s16, 1
      %p47 = por %p45, %p46
      %p48 = scmp.ne.s32.totalorder %s40, %s43
      %p49 = scmp.eq.s32.totalorder %s16, 0
      %p50 = por %p48, %p49
      %p51 = scmp.ne.s32.totalorder %s40, %s43
      %p52 = scmp.eq.s32.totalorder %s21, 1
      %p53 = por %p51, %p52
      %p54 = scmp.ne.s32.totalorder %s43, %s44
      %p55 = scmp.eq.s32.totalorder %s21, 0
      %p56 = por %p54, %p55
      %p57 = scmp.ne.s32.totalorder %s43, %s44
      %p58 = scmp.eq.s32.totalorder %s22, 1
      %p59 = por %p57, %p58
      %p61 = scmp.ne.s32.totalorder %s44, %s60
      %p62 = scmp.eq.s32.totalorder %s22, 0
      %p63 = por %p61, %p62
      %s65 = sadd.s32 %s64, 1
      %p68 = scmp.eq.s32.totalorder %s16, 1
      %p69 = scmp.ne.s32.totalorder %s64, %s66
      %p70 = scmp.eq.s32.totalorder %s16, 0
      %p71 = por %p69, %p70
      %p72 = scmp.ne.s32.totalorder %s64, %s66
      %p73 = scmp.eq.s32.totalorder %s21, 1
      %p74 = por %p72, %p73
      %p75 = scmp.ne.s32.totalorder %s66, %s67
      %p76 = scmp.eq.s32.totalorder %s21, 0
      %p77 = por %p75, %p76
      %p78 = scmp.ne.s32.totalorder %s66, %s67
      %p79 = scmp.eq.s32.totalorder %s22, 1
      %p80 = por %p78, %p79
      %p82 = scmp.ne.s32.totalorder %s67, %s81
      %p83 = scmp.eq.s32.totalorder %s22, 0
      %p84 = por %p82, %p83
      %s85 = ssub.s32 %s23, %s35
      %p86 = scmp.eq.s32.totalorder %s85, 0
      %s88 = sadd.s32 %s87, 1
      %s89 = scalar_select %p86, %s87, %s88
      %p92 = pneg %p86
      %p93 = scmp.eq.s32.totalorder %s16, 1
      %p94 = por %p92, %p93
      %p95 = scmp.ne.s32.totalorder %s87, %s90
      %p96 = scmp.eq.s32.totalorder %s16, 0
      %p97 = por %p95, %p96
      %p98 = scmp.ne.s32.totalorder %s87, %s90
      %p99 = scmp.eq.s32.totalorder %s21, 1
      %p100 = por %p98, %p99
      %p101 = scmp.ne.s32.totalorder %s90, %s91
      %p102 = scmp.eq.s32.totalorder %s21, 0
      %p103 = por %p101, %p102
      %p104 = scmp.ne.s32.totalorder %s90, %s91
      %p105 = scmp.eq.s32.totalorder %s22, 1
      %p106 = por %p104, %p105
      %p108 = scmp.ne.s32.totalorder %s91, %s107
      %p109 = scmp.eq.s32.totalorder %s22, 0
      %p110 = por %p108, %p109
      %s111 = ssub.s32 %s24, %s31
      %s112 = ssub.s32 %s23, %s35
      %s113 = sor.u32 %s111, %s112
      %p114 = scmp.eq.s32.totalorder %s113, 0
      %s116 = sadd.s32 %s115, 1
      %s117 = scalar_select %p114, %s115, %s116
      %p120 = pneg %p114
      %p121 = scmp.eq.s32.totalorder %s16, 1
      %p122 = por %p120, %p121
      %p123 = scmp.ne.s32.totalorder %s115, %s118
      %p124 = scmp.eq.s32.totalorder %s16, 0
      %p125 = por %p123, %p124
      %p126 = scmp.ne.s32.totalorder %s115, %s118
      %p127 = scmp.eq.s32.totalorder %s21, 1
      %p128 = por %p126, %p127
      %p129 = scmp.ne.s32.totalorder %s118, %s119
      %p130 = scmp.eq.s32.totalorder %s21, 0
      %p131 = por %p129, %p130
      %p132 = scmp.ne.s32.totalorder %s118, %s119
      %p133 = scmp.eq.s32.totalorder %s22, 1
      %p134 = por %p132, %p133
      %p136 = scmp.ne.s32.totalorder %s119, %s135
      %p137 = scmp.eq.s32.totalorder %s22, 0
      %p138 = por %p136, %p137
      %p139 = scmp.le.s32.totalorder 1, %s16
      %p140 = scmp.lt.s32.totalorder %s16, 3
      %p141 = pnand %p139, %p140
      %p142 = pneg %p141
      // Predicated region
      $region9: #{tpu_custom_call.1} parent=5 // pred_check
        _
      $region10: #{tpu_custom_call.1} parent=5 // pred_check_branch
        %144 = sbr.rel (%p141) target = $region12
      $region11: #{tpu_custom_call.1} parent=5 // pred_region
        %s145 = ssub.s32 %s16, 1
        // Predicated region
        $region13: #{tpu_custom_call.1} parent=11 // pred_check
          %p146 = pneg %p77
        $region14: #{tpu_custom_call.1} parent=11 // pred_check_branch
          %148 = sbr.rel (%p146) target = $region16
        $region15: #{tpu_custom_call.1} parent=11 // pred_region
          %150 = vsyncadd [#allocation6], 0
          %s151 = sshll.u32 %s1, 4
          %s152 = int_to_ptr.hbm [resolvable:$true] %s151
          %s153 = sshll.u32 [#allocation5], 4
          %s154 = int_to_ptr.vmem [resolvable:$true] %s153
          %159 = dma.hbm_to_vmem [thread:$0]  %s152, 512, %s154, [#allocation6], 128, 128, 8
        $region16: #{tpu_custom_call.1} parent=11 // pred_fallthru
          _
        // Predicated region
        $region17: #{tpu_custom_call.1} parent=11 // pred_check
          %p160 = pneg %p103
        $region18: #{tpu_custom_call.1} parent=11 // pred_check_branch
          %162 = sbr.rel (%p160) target = $region20
        $region19: #{tpu_custom_call.1} parent=11 // pred_region
          %164 = vsyncadd [#allocation6], 0
          %s165 = smul.addr %s25, 8
          %s166 = scalar_lea.hbm %s2, %s165
          %s168 = sshll.u32 %s166, 4
          %s169 = int_to_ptr.hbm [resolvable:$true] %s168
          %s170 = sshll.u32 [#allocation7], 4
          %s171 = int_to_ptr.vmem [resolvable:$true] %s170
          %173 = dma.hbm_to_vmem [thread:$0]  %s169, 128, %s171, [#allocation6]
        $region20: #{tpu_custom_call.1} parent=11 // pred_fallthru
          _
      $region12: #{tpu_custom_call.1} parent=5 // pred_fallthru
        _
      %p174 = scmp.lt.s32.totalorder %s16, 2
      // Predicated region
      $region21: #{tpu_custom_call.1} parent=5 // pred_check
        %p175 = pneg %p174
      $region22: #{tpu_custom_call.1} parent=5 // pred_check_branch
        %177 = sbr.rel (%p175) target = $region24
      $region23: #{tpu_custom_call.1} parent=5 // pred_region
        // Predicated region
        $region25: #{tpu_custom_call.1} parent=23 // pred_check
          %p178 = pneg %p50
        $region26: #{tpu_custom_call.1} parent=23 // pred_check_branch
          %180 = sbr.rel (%p178) target = $region28
        $region27: #{tpu_custom_call.1} parent=23 // pred_region
          %s181 = sand.u32 %s40, 1
          %s182 = scalar_lea.sflag [#allocation3], %s181
          %s183 = sand.u32 %s40, 1
          %s184 = smul.addr %s183, 8
          %s185 = scalar_lea.vmem [#allocation2], %s184
          %187 = vsyncadd %s182, 0
          %s188 = sadd.s32 %s23, %s24
          %s189 = smul.addr %s188, 8
          %s190 = scalar_lea.hbm %s0, %s189
          %s192 = sshll.u32 %s190, 4
          %s193 = int_to_ptr.hbm [resolvable:$true] %s192
          %s194 = sshll.u32 %s185, 4
          %s195 = int_to_ptr.vmem [resolvable:$true] %s194
          %197 = dma.hbm_to_vmem [thread:$0]  %s193, 128, %s195, %s182
        $region28: #{tpu_custom_call.1} parent=23 // pred_fallthru
          _
      $region24: #{tpu_custom_call.1} parent=5 // pred_fallthru
        _
      %p198 = scmp.le.s32.totalorder 1, %s16
      %p199 = scmp.lt.s32.totalorder %s16, 3
      %p200 = pnand %p198, %p199
      %p201 = pneg %p200
      // Predicated region
      $region29: #{tpu_custom_call.1} parent=5 // pred_check
        _
      $region30: #{tpu_custom_call.1} parent=5 // pred_check_branch
        %203 = sbr.rel (%p200) target = $region32
      $region31: #{tpu_custom_call.1} parent=5 // pred_region
        %s204 = ssub.s32 %s16, 1
        %s205 = sand.u32 %s43, 1
        %s206 = scalar_lea.sflag [#allocation3], %s205
        %s207 = sand.u32 %s43, 1
        %s208 = smul.addr %s207, 8
        %s209 = scalar_lea.vmem [#allocation2], %s208
        // Predicated region
        $region33: #{tpu_custom_call.1} parent=31 // pred_check
          %p210 = pneg %p56
        $region34: #{tpu_custom_call.1} parent=31 // pred_check_branch
          %212 = sbr.rel (%p210) target = $region36
        $region35: #{tpu_custom_call.1} parent=31 // pred_region
          %214 = dma.done %s206, 128
        $region36: #{tpu_custom_call.1} parent=31 // pred_fallthru
          _
        // Predicated region
        $region37: #{tpu_custom_call.1} parent=31 // pred_check
          %p215 = pneg %p77
        $region38: #{tpu_custom_call.1} parent=31 // pred_check_branch
          %217 = sbr.rel (%p215) target = $region40
        $region39: #{tpu_custom_call.1} parent=31 // pred_region
          %219 = dma.done [#allocation6], 512
        $region40: #{tpu_custom_call.1} parent=31 // pred_fallthru
          _
        // Predicated region
        $region41: #{tpu_custom_call.1} parent=31 // pred_check
          %p220 = pneg %p103
        $region42: #{tpu_custom_call.1} parent=31 // pred_check_branch
          %222 = sbr.rel (%p220) target = $region44
        $region43: #{tpu_custom_call.1} parent=31 // pred_region
          %224 = dma.done [#allocation6], 128
        $region44: #{tpu_custom_call.1} parent=31 // pred_fallthru
          _
        %s225 = sand.u32 %s43, 1
        %s226 = scalar_lea.sflag [#allocation3], %s225
        %s227 = sand.u32 %s43, 1
        %s228 = smul.addr %s227, 8
        %s229 = scalar_lea.vmem [#allocation2], %s228
        %p230 = pneg %p56
        %p231 = pneg %p53
        %p232 = pneg %p77
        %p233 = pneg %p74
        %p234 = pneg %p103
        %p235 = pneg %p100
        %p236 = pneg %p131
        %p237 = pneg %p128
        %s238 = sand.u32 %s118, 1
        %s239 = scalar_lea.sflag [#allocation4], %s238
        %s240 = sand.u32 %s118, 1
        %s241 = smul.addr %s240, 8
        %s242 = scalar_lea.vmem [#allocation8], %s241
        %v243 = vld [vmem:[%s209] sm:$0xff]
        %v244 = vld [vmem:[#allocation5] sm:$0xff]
        %v245 = vld [vmem:[#allocation5 + $0x8] sm:$0xff]
        %v246 = vld [vmem:[#allocation5 + $0x10] sm:$0xff]
        %v247 = vld [vmem:[#allocation5 + $0x18] sm:$0xff]
        %v248 = vld [vmem:[#allocation7] sm:$0xff]
        %vm249 = vcmask 261120
        %v251 = vsel %vm249, %v243, 0
        %253 = vmatpush.msra.mxu0 0.0
        %254 = vmatpush.msra.mxu0 0.0
        %255 = vmatpush.msra.mxu0 0.0
        %256 = vmatpush.msra.mxu0 0.0
        %257 = vmatpush.msra.mxu0 0.0
        %258 = vmatpush.msra.mxu0 0.0
        %259 = vmatpush.msra.mxu0 0.0
        %260 = vmatpush.msra.mxu0 0.0
        %261 = vmatpush.msra.mxu0 0.0
        %262 = vmatpush.msra.mxu0 0.0
        %263 = vmatpush.msra.mxu0 0.0
        %264 = vmatpush.msra.mxu0 0.0
        %265 = vmatpush.msra.mxu0 %v247
        %266 = vmatpush.msra.mxu0 %v246
        %267 = vmatpush.msra.mxu0 %v245
        %268 = vmatpush.msra.mxu0 %v244
        %269 = vmatmul.f32.gmra.mxu0 %v251
        %v270 = vpop.f32.mrf.mxu0
        %v271 = vadd.f32 %v248, %v270
        %272 = vdwg.mxu0
        %273 = vst.msk [vmem:[%s242] sm:$0xff] %vm249, %v271
        %s274 = sand.u32 %s118, 1
        %s275 = scalar_lea.sflag [#allocation4], %s274
        %s276 = sand.u32 %s118, 1
        %s277 = smul.addr %s276, 8
        %s278 = scalar_lea.vmem [#allocation8], %s277
        // Predicated region
        $region45: #{tpu_custom_call.1} parent=31 // pred_check
          %p279 = pneg %p128
        $region46: #{tpu_custom_call.1} parent=31 // pred_check_branch
          %281 = sbr.rel (%p279) target = $region48
        $region47: #{tpu_custom_call.1} parent=31 // pred_region
          %283 = vsyncadd %s275, 0
          %s284 = sadd.s32 %s25, %s26
          %s285 = smul.addr %s284, 8
          %s286 = scalar_lea.hbm %s3, %s285
          %s288 = sshll.u32 %s278, 4
          %s289 = int_to_ptr.vmem [resolvable:$true] %s288
          %s290 = sshll.u32 %s286, 4
          %s291 = int_to_ptr.hbm [resolvable:$true] %s290
          %293 = dma.vmem_to_hbm [thread:$0]  %s289, 128, %s291, %s275
        $region48: #{tpu_custom_call.1} parent=31 // pred_fallthru
          _
      $region32: #{tpu_custom_call.1} parent=5 // pred_fallthru
        _
      %p294 = scmp.le.s32.totalorder 2, %s16
      // Predicated region
      $region49: #{tpu_custom_call.1} parent=5 // pred_check
        %p295 = pneg %p294
      $region50: #{tpu_custom_call.1} parent=5 // pred_check_branch
        %297 = sbr.rel (%p295) target = $region52
      $region51: #{tpu_custom_call.1} parent=5 // pred_region
        %s298 = ssub.s32 %s16, 2
        // Predicated region
        $region53: #{tpu_custom_call.1} parent=51 // pred_check
          %p299 = pneg %p134
        $region54: #{tpu_custom_call.1} parent=51 // pred_check_branch
          %301 = sbr.rel (%p299) target = $region56
        $region55: #{tpu_custom_call.1} parent=51 // pred_region
          %s302 = sand.u32 %s119, 1
          %s303 = scalar_lea.sflag [#allocation4], %s302
          %s304 = sand.u32 %s119, 1
          %s305 = smul.addr %s304, 8
          %s306 = scalar_lea.vmem [#allocation8], %s305
          %308 = dma.done %s303, 128
        $region56: #{tpu_custom_call.1} parent=51 // pred_fallthru
          _
      $region52: #{tpu_custom_call.1} parent=5 // pred_fallthru
        _
    $region6: #{tpu_custom_call.1} parent=1 // loop_footer
      %s20 = sadd.s32 1, %s16
    $region7: #{tpu_custom_call.1} parent=1 // loop_footer_branch
      %15 = sbr.rel target = $region3
    $region8: #{tpu_custom_call.1} parent=1 // loop_exit
      _
    %309 = vsyncpa [#allocation3], 1
    %s310 = scalar_lea.sflag [#allocation3], 1
    %311 = vsyncpa %s310, 1
    %312 = vsyncpa [#allocation6], 1
    %313 = vsyncpa [#allocation4], 1
    %s314 = scalar_lea.sflag [#allocation4], 1
    %315 = vsyncpa %s314, 1

// kernel: tpu_custom_call.1
$region0: #{tpu_custom_call.1}
  #allocation0 [shape = 'u32[]', space=smem, size = 0x4, offset = 0x4, fixed_abs, tag = 'smem constant byte address 0x4 - core index']
  #allocation1 [shape = 'u32[72,128]{1,0:T(1,128)}', space=vmem, size = 0x9000, scoped, tag = 'internal scratch']
  %s0 = inlined_call_operand.hbm [shape: f32[2,8,32], index: 0, kind: input, shape index: {}]
  %s1 = inlined_call_operand.hbm [shape: f32[32,32], index: 1, kind: input, shape index: {}]
  %s2 = inlined_call_operand.hbm [shape: f32[8,32], index: 2, kind: input, shape index: {}]
  %s3 = inlined_call_operand.hbm [shape: f32[2,8,32], index: 3, kind: output, shape index: {}]
  %s4 = sld [smem:[#allocation0]]
  $region57: #{tpu_custom_call.1} parent=0
    _
  %s6 = ssub.s32 1, %s4
  %s7 = scalar_select 0, %s6, %s4
  $region1: #{tpu_custom_call.1} parent=0
    #allocation2 [shape = 'u8[8192]{0}', space=vmem, size = 0x2000, scoped, tag = 'input window, operand 0']
    #allocation3 [shape = 's32[2]{0}', space=sflag, size = 0x8, scoped, tag = 'scoped memory for tpu_custom_call.1']
    #allocation4 [shape = 's32[2]{0}', space=sflag, size = 0x8, scoped, tag = 'scoped memory for tpu_custom_call.1']
    #allocation5 [shape = 'u8[16384]{0}', space=vmem, size = 0x4000, scoped, tag = 'input window, operand 1, single buffered']
    #allocation6 [shape = 's32[1]{0}', space=sflag, size = 0x4, scoped, tag = 'scoped memory for tpu_custom_call.1']
    #allocation7 [shape = 'u8[4096]{0}', space=vmem, size = 0x1000, scoped, tag = 'input window, operand 2, single buffered']
    #allocation8 [shape = 'u8[8192]{0}', space=vmem, size = 0x2000, scoped, tag = 'output window, operand 0']
    %8 = vsyncpa [#allocation3], 0
    %s9 = scalar_lea.sflag [#allocation3], 1
    %10 = vsyncpa %s9, 0
    %11 = vsyncpa [#allocation6], 0
    %12 = vsyncpa [#allocation4], 0
    %s13 = scalar_lea.sflag [#allocation4], 1
    %14 = vsyncpa %s13, 0
    loop: start=0, step=1, limit=4
    $region2: #{tpu_custom_call.1} parent=1 // loop_pre_header
      _
    $region3: #{tpu_custom_call.1} parent=1 // loop_header
      %s16 = sphi 0, %s20
      %p17 = scmp.ge.s32.totalorder %s16, 4
      %s23 = sphi 0, %s35
      %s24 = sphi 0, %s31
      %s25 = sphi 0, %s23
      %s26 = sphi 0, %s24
      %s27 = sphi 0, %s25
      %s28 = sphi 0, %s26
      %s40 = sphi 0, %s42
      %s43 = sphi 0, %s40
      %s44 = sphi 0, %s43
      %s60 = sphi 0, %s44
      %s64 = sphi 0, %s64
      %s66 = sphi 0, %s64
      %s67 = sphi 0, %s66
      %s81 = sphi 0, %s67
      %s87 = sphi 0, %s89
      %s90 = sphi 0, %s87
      %s91 = sphi 0, %s90
      %s107 = sphi 0, %s91
      %s115 = sphi 0, %s117
      %s118 = sphi 0, %s115
      %s119 = sphi 0, %s118
      %s135 = sphi 0, %s119
    $region4: #{tpu_custom_call.1} parent=1 // loop_header_branch
      %19 = sbr.rel (%p17) target = $region8
    $region5: #{tpu_custom_call.1} parent=1 // loop_body
      %s21 = ssub.s32 %s16, 1
      %s22 = ssub.s32 %s16, 2
      %s29 = sadd.s32 1, %s24
      %p30 = scmp.ge.s32.totalorder %s29, 2
      %s31 = scalar_select %p30, 0, %s29
      %s32 = sadd.s32 1, %s23
      %s33 = scalar_select %p30, %s32, %s23
      %p34 = scmp.ge.s32.totalorder %s33, 1
      %s35 = scalar_select %p34, 0, %s33
      %s36 = ssub.s32 %s24, %s31
      %s37 = ssub.s32 %s23, %s35
      %s38 = sor.u32 %s36, %s37
      %p39 = scmp.eq.s32.totalorder %s38, 0
      %s41 = sadd.s32 %s40, 1
      %s42 = scalar_select %p39, %s40, %s41
      %p45 = pneg %p39
      %p46 = scmp.eq.s32.totalorder %s16, 1
      %p47 = por %p45, %p46
      %p48 = scmp.ne.s32.totalorder %s40, %s43
      %p49 = scmp.eq.s32.totalorder %s16, 0
      %p50 = por %p48, %p49
      %p51 = scmp.ne.s32.totalorder %s40, %s43
      %p52 = scmp.eq.s32.totalorder %s21, 1
      %p53 = por %p51, %p52
      %p54 = scmp.ne.s32.totalorder %s43, %s44
      %p55 = scmp.eq.s32.totalorder %s21, 0
      %p56 = por %p54, %p55
      %p57 = scmp.ne.s32.totalorder %s43, %s44
      %p58 = scmp.eq.s32.totalorder %s22, 1
      %p59 = por %p57, %p58
      %p61 = scmp.ne.s32.totalorder %s44, %s60
      %p62 = scmp.eq.s32.totalorder %s22, 0
      %p63 = por %p61, %p62
      %s65 = sadd.s32 %s64, 1
      %p68 = scmp.eq.s32.totalorder %s16, 1
      %p69 = scmp.ne.s32.totalorder %s64, %s66
      %p70 = scmp.eq.s32.totalorder %s16, 0
      %p71 = por %p69, %p70
      %p72 = scmp.ne.s32.totalorder %s64, %s66
      %p73 = scmp.eq.s32.totalorder %s21, 1
      %p74 = por %p72, %p73
      %p75 = scmp.ne.s32.totalorder %s66, %s67
      %p76 = scmp.eq.s32.totalorder %s21, 0
      %p77 = por %p75, %p76
      %p78 = scmp.ne.s32.totalorder %s66, %s67
      %p79 = scmp.eq.s32.totalorder %s22, 1
      %p80 = por %p78, %p79
      %p82 = scmp.ne.s32.totalorder %s67, %s81
      %p83 = scmp.eq.s32.totalorder %s22, 0
      %p84 = por %p82, %p83
      %s85 = ssub.s32 %s23, %s35
      %p86 = scmp.eq.s32.totalorder %s85, 0
      %s88 = sadd.s32 %s87, 1
      %s89 = scalar_select %p86, %s87, %s88
      %p92 = pneg %p86
      %p93 = scmp.eq.s32.totalorder %s16, 1
      %p94 = por %p92, %p93
      %p95 = scmp.ne.s32.totalorder %s87, %s90
      %p96 = scmp.eq.s32.totalorder %s16, 0
      %p97 = por %p95, %p96
      %p98 = scmp.ne.s32.totalorder %s87, %s90
      %p99 = scmp.eq.s32.totalorder %s21, 1
      %p100 = por %p98, %p99
      %p101 = scmp.ne.s32.totalorder %s90, %s91
      %p102 = scmp.eq.s32.totalorder %s21, 0
      %p103 = por %p101, %p102
      %p104 = scmp.ne.s32.totalorder %s90, %s91
      %p105 = scmp.eq.s32.totalorder %s22, 1
      %p106 = por %p104, %p105
      %p108 = scmp.ne.s32.totalorder %s91, %s107
      %p109 = scmp.eq.s32.totalorder %s22, 0
      %p110 = por %p108, %p109
      %s111 = ssub.s32 %s24, %s31
      %s112 = ssub.s32 %s23, %s35
      %s113 = sor.u32 %s111, %s112
      %p114 = scmp.eq.s32.totalorder %s113, 0
      %s116 = sadd.s32 %s115, 1
      %s117 = scalar_select %p114, %s115, %s116
      %p120 = pneg %p114
      %p121 = scmp.eq.s32.totalorder %s16, 1
      %p122 = por %p120, %p121
      %p123 = scmp.ne.s32.totalorder %s115, %s118
      %p124 = scmp.eq.s32.totalorder %s16, 0
      %p125 = por %p123, %p124
      %p126 = scmp.ne.s32.totalorder %s115, %s118
      %p127 = scmp.eq.s32.totalorder %s21, 1
      %p128 = por %p126, %p127
      %p129 = scmp.ne.s32.totalorder %s118, %s119
      %p130 = scmp.eq.s32.totalorder %s21, 0
      %p131 = por %p129, %p130
      %p132 = scmp.ne.s32.totalorder %s118, %s119
      %p133 = scmp.eq.s32.totalorder %s22, 1
      %p134 = por %p132, %p133
      %p136 = scmp.ne.s32.totalorder %s119, %s135
      %p137 = scmp.eq.s32.totalorder %s22, 0
      %p138 = por %p136, %p137
      %p139 = scmp.le.s32.totalorder 1, %s16
      %p140 = scmp.lt.s32.totalorder %s16, 3
      %p141 = pnand %p139, %p140
      %p142 = pneg %p141
      // Predicated region
      $region9: #{tpu_custom_call.1} parent=5 // pred_check
        _
      $region10: #{tpu_custom_call.1} parent=5 // pred_check_branch
        %144 = sbr.rel (%p141) target = $region12
      $region11: #{tpu_custom_call.1} parent=5 // pred_region
        %s145 = ssub.s32 %s16, 1
        // Predicated region
        $region13: #{tpu_custom_call.1} parent=11 // pred_check
          %p146 = pneg %p77
        $region14: #{tpu_custom_call.1} parent=11 // pred_check_branch
          %148 = sbr.rel (%p146) target = $region16
        $region15: #{tpu_custom_call.1} parent=11 // pred_region
          %150 = vsyncadd [#allocation6], 0
          %s151 = sshll.u32 %s1, 4
          %s152 = int_to_ptr.hbm [resolvable:$true] %s151
          %s153 = sshll.u32 [#allocation5], 4
          %s154 = int_to_ptr.vmem [resolvable:$true] %s153
          %159 = dma.hbm_to_vmem [thread:$0]  %s152, 512, %s154, [#allocation6], 128, 128, 8
        $region16: #{tpu_custom_call.1} parent=11 // pred_fallthru
          _
        // Predicated region
        $region17: #{tpu_custom_call.1} parent=11 // pred_check
          %p160 = pneg %p103
        $region18: #{tpu_custom_call.1} parent=11 // pred_check_branch
          %162 = sbr.rel (%p160) target = $region20
        $region19: #{tpu_custom_call.1} parent=11 // pred_region
          %164 = vsyncadd [#allocation6], 0
          %s165 = smul.addr %s25, 8
          %s166 = scalar_lea.hbm %s2, %s165
          %s168 = sshll.u32 %s166, 4
          %s169 = int_to_ptr.hbm [resolvable:$true] %s168
          %s170 = sshll.u32 [#allocation7], 4
          %s171 = int_to_ptr.vmem [resolvable:$true] %s170
          %173 = dma.hbm_to_vmem [thread:$0]  %s169, 128, %s171, [#allocation6]
        $region20: #{tpu_custom_call.1} parent=11 // pred_fallthru
          _
      $region12: #{tpu_custom_call.1} parent=5 // pred_fallthru
        _
      %p174 = scmp.lt.s32.totalorder %s16, 2
      // Predicated region
      $region21: #{tpu_custom_call.1} parent=5 // pred_check
        %p175 = pneg %p174
      $region22: #{tpu_custom_call.1} parent=5 // pred_check_branch
        %177 = sbr.rel (%p175) target = $region24
      $region23: #{tpu_custom_call.1} parent=5 // pred_region
        // Predicated region
        $region25: #{tpu_custom_call.1} parent=23 // pred_check
          %p178 = pneg %p50
        $region26: #{tpu_custom_call.1} parent=23 // pred_check_branch
          %180 = sbr.rel (%p178) target = $region28
        $region27: #{tpu_custom_call.1} parent=23 // pred_region
          %s181 = sand.u32 %s40, 1
          %s182 = scalar_lea.sflag [#allocation3], %s181
          %s183 = sand.u32 %s40, 1
          %s184 = smul.addr %s183, 8
          %s185 = scalar_lea.vmem [#allocation2], %s184
          %187 = vsyncadd %s182, 0
          %s188 = sadd.s32 %s23, %s24
          %s189 = smul.addr %s188, 8
          %s190 = scalar_lea.hbm %s0, %s189
          %s192 = sshll.u32 %s190, 4
          %s193 = int_to_ptr.hbm [resolvable:$true] %s192
          %s194 = sshll.u32 %s185, 4
          %s195 = int_to_ptr.vmem [resolvable:$true] %s194
          %197 = dma.hbm_to_vmem [thread:$0]  %s193, 128, %s195, %s182
        $region28: #{tpu_custom_call.1} parent=23 // pred_fallthru
          _
      $region24: #{tpu_custom_call.1} parent=5 // pred_fallthru
        _
      %p198 = scmp.le.s32.totalorder 1, %s16
      %p199 = scmp.lt.s32.totalorder %s16, 3
      %p200 = pnand %p198, %p199
      %p201 = pneg %p200
      // Predicated region
      $region29: #{tpu_custom_call.1} parent=5 // pred_check
        _
      $region30: #{tpu_custom_call.1} parent=5 // pred_check_branch
        %203 = sbr.rel (%p200) target = $region32
      $region31: #{tpu_custom_call.1} parent=5 // pred_region
        %s204 = ssub.s32 %s16, 1
        %s205 = sand.u32 %s43, 1
        %s206 = scalar_lea.sflag [#allocation3], %s205
        %s207 = sand.u32 %s43, 1
        %s208 = smul.addr %s207, 8
        %s209 = scalar_lea.vmem [#allocation2], %s208
        // Predicated region
        $region33: #{tpu_custom_call.1} parent=31 // pred_check
          %p210 = pneg %p56
        $region34: #{tpu_custom_call.1} parent=31 // pred_check_branch
          %212 = sbr.rel (%p210) target = $region36
        $region35: #{tpu_custom_call.1} parent=31 // pred_region
          %214 = dma.done %s206, 128
        $region36: #{tpu_custom_call.1} parent=31 // pred_fallthru
          _
        // Predicated region
        $region37: #{tpu_custom_call.1} parent=31 // pred_check
          %p215 = pneg %p77
        $region38: #{tpu_custom_call.1} parent=31 // pred_check_branch
          %217 = sbr.rel (%p215) target = $region40
        $region39: #{tpu_custom_call.1} parent=31 // pred_region
          %219 = dma.done [#allocation6], 512
        $region40: #{tpu_custom_call.1} parent=31 // pred_fallthru
          _
        // Predicated region
        $region41: #{tpu_custom_call.1} parent=31 // pred_check
          %p220 = pneg %p103
        $region42: #{tpu_custom_call.1} parent=31 // pred_check_branch
          %222 = sbr.rel (%p220) target = $region44
        $region43: #{tpu_custom_call.1} parent=31 // pred_region
          %224 = dma.done [#allocation6], 128
        $region44: #{tpu_custom_call.1} parent=31 // pred_fallthru
          _
        %s225 = sand.u32 %s43, 1
        %s226 = scalar_lea.sflag [#allocation3], %s225
        %s227 = sand.u32 %s43, 1
        %s228 = smul.addr %s227, 8
        %s229 = scalar_lea.vmem [#allocation2], %s228
        %p230 = pneg %p56
        %p231 = pneg %p53
        %p232 = pneg %p77
        %p233 = pneg %p74
        %p234 = pneg %p103
        %p235 = pneg %p100
        %p236 = pneg %p131
        %p237 = pneg %p128
        %s238 = sand.u32 %s118, 1
        %s239 = scalar_lea.sflag [#allocation4], %s238
        %s240 = sand.u32 %s118, 1
        %s241 = smul.addr %s240, 8
        %s242 = scalar_lea.vmem [#allocation8], %s241
        %v243 = vld [vmem:[%s209] sm:$0xff]
        %v244 = vld [vmem:[#allocation5] sm:$0xff]
        %v245 = vld [vmem:[#allocation5 + $0x8] sm:$0xff]
        %v246 = vld [vmem:[#allocation5 + $0x10] sm:$0xff]
        %v247 = vld [vmem:[#allocation5 + $0x18] sm:$0xff]
        %v248 = vld [vmem:[#allocation7] sm:$0xff]
        %vm249 = vcmask 261120
        %v251 = vsel %vm249, %v243, 0
        %253 = vmatpush.msra.mxu0 0.0
        %254 = vmatpush.msra.mxu0 0.0
        %255 = vmatpush.msra.mxu0 0.0
        %256 = vmatpush.msra.mxu0 0.0
        %257 = vmatpush.msra.mxu0 0.0
        %258 = vmatpush.msra.mxu0 0.0
        %259 = vmatpush.msra.mxu0 0.0
        %260 = vmatpush.msra.mxu0 0.0
        %261 = vmatpush.msra.mxu0 0.0
        %262 = vmatpush.msra.mxu0 0.0
        %263 = vmatpush.msra.mxu0 0.0
        %264 = vmatpush.msra.mxu0 0.0
        %265 = vmatpush.msra.mxu0 %v247
        %266 = vmatpush.msra.mxu0 %v246
        %267 = vmatpush.msra.mxu0 %v245
        %268 = vmatpush.msra.mxu0 %v244
        %269 = vmatmul.f32.gmra.mxu0 %v251
        %v270 = vpop.f32.mrf.mxu0
        %v271 = vadd.f32 %v248, %v270
        %272 = vdwg.mxu0
        %273 = vst.msk [vmem:[%s242] sm:$0xff] %vm249, %v271
        %s274 = sand.u32 %s118, 1
        %s275 = scalar_lea.sflag [#allocation4], %s274
        %s276 = sand.u32 %s118, 1
        %s277 = smul.addr %s276, 8
        %s278 = scalar_lea.vmem [#allocation8], %s277
        // Predicated region
        $region45: #{tpu_custom_call.1} parent=31 // pred_check
          %p279 = pneg %p128
        $region46: #{tpu_custom_call.1} parent=31 // pred_check_branch
          %281 = sbr.rel (%p279) target = $region48
        $region47: #{tpu_custom_call.1} parent=31 // pred_region
          %283 = vsyncadd %s275, 0
          %s284 = sadd.s32 %s25, %s26
          %s285 = smul.addr %s284, 8
          %s286 = scalar_lea.hbm %s3, %s285
          %s288 = sshll.u32 %s278, 4
          %s289 = int_to_ptr.vmem [resolvable:$true] %s288
          %s290 = sshll.u32 %s286, 4
          %s291 = int_to_ptr.hbm [resolvable:$true] %s290
          %293 = dma.vmem_to_hbm [thread:$0]  %s289, 128, %s291, %s275
        $region48: #{tpu_custom_call.1} parent=31 // pred_fallthru
          _
      $region32: #{tpu_custom_call.1} parent=5 // pred_fallthru
        _
      %p294 = scmp.le.s32.totalorder 2, %s16
      // Predicated region
      $region49: #{tpu_custom_call.1} parent=5 // pred_check
        %p295 = pneg %p294
      $region50: #{tpu_custom_call.1} parent=5 // pred_check_branch
        %297 = sbr.rel (%p295) target = $region52
      $region51: #{tpu_custom_call.1} parent=5 // pred_region
        %s298 = ssub.s32 %s16, 2
        // Predicated region
        $region53: #{tpu_custom_call.1} parent=51 // pred_check
          %p299 = pneg %p134
        $region54: #{tpu_custom_call.1} parent=51 // pred_check_branch
          %301 = sbr.rel (%p299) target = $region56
        $region55: #{tpu_custom_call.1} parent=51 // pred_region
          %s302 = sand.u32 %s119, 1
          %s303 = scalar_lea.sflag [#allocation4], %s302
          %s304 = sand.u32 %s119, 1
          %s305 = smul.addr %s304, 8
          %s306 = scalar_lea.vmem [#allocation8], %s305
          %308 = dma.done %s303, 128
        $region56: #{tpu_custom_call.1} parent=51 // pred_fallthru
          _
      $region52: #{tpu_custom_call.1} parent=5 // pred_fallthru
        _
    $region6: #{tpu_custom_call.1} parent=1 // loop_footer
      %s20 = sadd.s32 1, %s16
    $region7: #{tpu_custom_call.1} parent=1 // loop_footer_branch
      %15 = sbr.rel target = $region3
    $region8: #{tpu_custom_call.1} parent=1 // loop_exit
      _
    %309 = vsyncpa [#allocation3], 1
    %s310 = scalar_lea.sflag [#allocation3], 1
    %311 = vsyncpa %s310, 1
    %312 = vsyncpa [#allocation6], 1
    %313 = vsyncpa [#allocation4], 1
    %s314 = scalar_lea.sflag [#allocation4], 1
    %315 = vsyncpa %s314, 1

</llo_original>
